<compile_context>
chip_gen: v7x
topology: tpu7x:2x2x1
jax: 0.10.0
libtpu: 0.0.40
codegen_flags: <defaults>
</compile_context>

<pallas_src>
import functools
import math

import jax
import jax.numpy as jnp
from jax.experimental import pallas as pl
from jax.experimental.pallas import tpu as pltpu

LANE = 128  # lane-dense output (multiple of 128 -> unmasked vst)


def _grelu_kernel(x_ref, o_ref, *, c, inv_c):
    # Load in the I/O dtype, compute in f32 on the VPU/EUP, store back in the
    # I/O dtype. In-register cast is free under the DMA bottleneck.
    x = x_ref[...].astype(jnp.float32)
    z = c * x
    # Numerically stable softplus: softplus(z) = max(z, 0) + log1p(exp(-|z|))
    # TODO(synk): if bf16 I/O on v7x ever saturates the EUP slot, switch to a
    # bf16 EUP path (v6e/v7x only) or a VPU polynomial for log1p on [0, 1].
    sp = jnp.maximum(z, 0.0) + jnp.log1p(jnp.exp(-jnp.abs(z)))
    o_ref[...] = (sp * inv_c).astype(o_ref.dtype)


def _softplus_stable(z):
    return jnp.maximum(z, 0.0) + jnp.log1p(jnp.exp(-jnp.abs(z)))


def _block_bytes_for_device():
    # ~4 MiB blocks on v6e/v7x (16 MiB total double-buffered, under the 32 MiB
    # default scoped-VMEM limit); 2 MiB elsewhere (v5e default limit is 16 MiB).
    try:
        kind = jax.devices()[0].device_kind.lower()
    except Exception:
        kind = ""
    if ("v6" in kind) or ("v7" in kind):
        return 4 << 20
    return 2 << 20


def _grelu_2d(x2d, io_dtype, c, inv_c):
    rows = x2d.shape[0]
    itemsize = jnp.dtype(io_dtype).itemsize
    # Native sublane pack: 8 rows for 4-byte, 16 for 2-byte, 32 for 1-byte.
    pack = max(8, 32 // itemsize)
    # Dtype-aware tile rows: every block is ~BLOCK_BYTES regardless of dtype.
    target_rows = max(pack, _block_bytes_for_device() // (LANE * itemsize))
    rows_rounded = ((rows + pack - 1) // pack) * pack
    tile_rows = min(target_rows, rows_rounded)
    grid = (pl.cdiv(rows, tile_rows),)

    return pl.pallas_call(
        functools.partial(_grelu_kernel, c=c, inv_c=inv_c),
        out_shape=jax.ShapeDtypeStruct((rows, LANE), io_dtype),
        grid=grid,
        in_specs=[pl.BlockSpec((tile_rows, LANE), lambda i: (i, 0))],
        out_specs=pl.BlockSpec((tile_rows, LANE), lambda i: (i, 0)),
        compiler_params=pltpu.CompilerParams(
            # Megacore-shards the streaming axis where supported.
            # TODO(synk): on v7x, sweep pltpu.CORE_PARALLEL to confirm both
            # TensorCores stream this bandwidth-bound axis.
            dimension_semantics=("parallel",)),
    )(x2d)


def grelu(x, alpha: float = 1.5, beta: float = 1.2):
    orig_shape = x.shape
    orig_dtype = x.dtype

    # Keep 16/32-bit float dtypes as kernel I/O (halves HBM bytes for 16-bit);
    # anything else is cast once in the wrapper. Compute is always f32.
    if orig_dtype in (jnp.float32, jnp.bfloat16, jnp.float16):
        io_dtype = orig_dtype
    else:
        io_dtype = jnp.float32

    # Scalar constants baked in at trace time (no scalar prefetch, no
    # per-element divide). NOTE: alpha == 1.0 gives c == 0 -> inf, matching
    # the reference module's own degeneracy.
    c = float(beta) * math.log(float(alpha))
    inv_c = 1.0 / c

    xf = x.reshape(-1)
    if xf.dtype != io_dtype:
        xf = xf.astype(io_dtype)
    n = xf.shape[0]

    # No pad / [:n] round trips: kernel handles the 128-aligned prefix, a tiny
    # jnp epilogue handles the (<128 element) tail.
    n_main = n - (n % LANE)

    parts = []
    if n_main > 0:
        x2d = xf[:n_main].reshape(n_main // LANE, LANE)
        parts.append(_grelu_2d(x2d, io_dtype, c, inv_c).reshape(-1))
    if n_main < n:
        tail = xf[n_main:].astype(jnp.float32)
        parts.append((_softplus_stable(c * tail) * inv_c).astype(io_dtype))

    y = parts[0] if len(parts) == 1 else jnp.concatenate(parts)
    y = y.reshape(orig_shape)
    if y.dtype != orig_dtype:
        y = y.astype(orig_dtype)
    return y


def grelu_ref(x, alpha: float = 1.5, beta: float = 1.2):
    xf = x.astype(jnp.float32)
    a = jnp.float32(alpha)
    b = jnp.float32(beta)
    return (jnp.log(1.0 + jnp.power(a, b * xf)) / (b * jnp.log(a))).astype(x.dtype)


if __name__ == "__main__":
    key = jax.random.PRNGKey(0)
    alpha, beta = 1.5, 1.2
    x = jax.random.normal(key, (2, 4, 16, 16), dtype=jnp.float32)

    y = jax.block_until_ready(grelu(x, alpha=alpha, beta=beta))

    y_ref = grelu_ref(x, alpha=alpha, beta=beta)
    assert y.shape == x.shape and y.dtype == x.dtype
    assert jnp.allclose(y, y_ref, atol=1e-5, rtol=1e-5)

    print("KERNEL_OK")
</pallas_src>

<mosaic_0001>
module attributes {stable_mosaic.version = 11 : i64} {
  func.func @_grelu_kernel(%arg0: i32, %arg1: memref<16x128xf32, #tpu.memory_space<vmem>>, %arg2: memref<16x128xf32, #tpu.memory_space<vmem>>) attributes {dimension_semantics = [#tpu.dimension_semantics<parallel>], iteration_bounds = array<i64: 1>, scalar_prefetch = 0 : i64, scratch_operands = 0 : i64, tpu.core_type = #tpu.core_type<tc>, window_params = [{transform_indices = @transform_0, window_bounds = array<i64: 16, 128>}, {transform_indices = @transform_1, window_bounds = array<i64: 16, 128>}]} {
    %c0 = arith.constant 0 : index
    %c0_0 = arith.constant 0 : index
    %0 = vector.load %arg1[%c0, %c0_0] : memref<16x128xf32, #tpu.memory_space<vmem>>, vector<16x128xf32>
    %cst = arith.constant 0.486558139 : f32
    %1 = vector.broadcast %cst : f32 to vector<16x128xf32>
    %2 = arith.mulf %1, %0 : vector<16x128xf32>
    %cst_1 = arith.constant 0.000000e+00 : f32
    %3 = vector.broadcast %cst_1 : f32 to vector<16x128xf32>
    %4 = arith.maximumf %2, %3 : vector<16x128xf32>
    %5 = math.absf %2 : vector<16x128xf32>
    %cst_2 = arith.constant 0.000000e+00 : f32
    %6 = vector.broadcast %cst_2 : f32 to vector<16x128xf32>
    %7 = arith.subf %6, %5 : vector<16x128xf32>
    %8 = math.exp %7 : vector<16x128xf32>
    %9 = math.log1p %8 : vector<16x128xf32>
    %10 = arith.addf %4, %9 : vector<16x128xf32>
    %cst_3 = arith.constant 2.05525279 : f32
    %11 = vector.broadcast %cst_3 : f32 to vector<16x128xf32>
    %12 = arith.mulf %10, %11 : vector<16x128xf32>
    %c0_4 = arith.constant 0 : index
    %c0_5 = arith.constant 0 : index
    %13 = vector.load %arg2[%c0_4, %c0_5] : memref<16x128xf32, #tpu.memory_space<vmem>>, vector<16x128xf32>
    tpu.vector_store %arg2[%c0_4, %c0_5], %12 {strides = array<i32>} : memref<16x128xf32, #tpu.memory_space<vmem>>, vector<16x128xf32>,
    return
  }
  func.func @transform_0(%arg0: i32) -> (i32, i32) {
    %c0_i32 = arith.constant 0 : i32
    %c0_i32_0 = arith.constant 0 : i32
    return %arg0, %c0_i32 : i32, i32
  }
  func.func @transform_1(%arg0: i32) -> (i32, i32) {
    %c0_i32 = arith.constant 0 : i32
    %c0_i32_0 = arith.constant 0 : i32
    return %arg0, %c0_i32 : i32, i32
  }
}

</mosaic_0001>

<llo_original>
// kernel: tpu_custom_call.1
$region0: #{tpu_custom_call.1}
  #allocation0 [shape = 'u32[]', space=smem, size = 0x4, offset = 0x4, fixed_abs, tag = 'smem constant byte address 0x4 - core index']
  #allocation1 [shape = 'u32[144,128]{1,0:T(1,128)}', space=vmem, size = 0x12000, scoped, tag = 'internal scratch']
  %s0 = inlined_call_operand.hbm [shape: f32[16,128], index: 0, kind: input, shape index: {}]
  %s1 = inlined_call_operand.hbm [shape: f32[16,128], index: 1, kind: output, shape index: {}]
  %s2 = sld [smem:[#allocation0]]
  $region18: #{tpu_custom_call.1} parent=0
    _
  %s4 = ssub.s32 1, %s2
  %s5 = scalar_select 0, %s4, %s2
  $region1: #{tpu_custom_call.1} parent=0
    #allocation2 [shape = 'u8[8192]{0}', space=vmem, size = 0x2000, scoped, tag = 'input window, operand 0, single buffered']
    #allocation3 [shape = 's32[1]{0}', space=sflag, size = 0x4, scoped, tag = 'scoped memory for tpu_custom_call.1']
    #allocation4 [shape = 's32[1]{0}', space=sflag, size = 0x4, scoped, tag = 'scoped memory for tpu_custom_call.1']
    #allocation5 [shape = 'u8[8192]{0}', space=vmem, size = 0x2000, scoped, tag = 'output window, operand 0, single buffered']
    %6 = vsyncpa [#allocation3], 0
    %7 = vsyncpa [#allocation4], 0
    // Predicated region
    $region2: #{tpu_custom_call.1} parent=1 // pred_check
      _
    $region3: #{tpu_custom_call.1} parent=1 // pred_check_branch
      %9 = sbr.rel (0) target = $region5
    $region4: #{tpu_custom_call.1} parent=1 // pred_region
      %s11 = ssub.s32 256, 256
      %12 = vsyncadd [#allocation3], %s11
      %s13 = sshll.u32 [#allocation2], 4
      %s14 = int_to_ptr.vmem [resolvable:$true] %s13
      %19 = dma.hbm_to_vmem [thread:$0]  %s0, 256, %s14, [#allocation3], 128, 128, 8
    $region5: #{tpu_custom_call.1} parent=1 // pred_fallthru
      _
    // Predicated region
    $region6: #{tpu_custom_call.1} parent=1 // pred_check
      _
    $region7: #{tpu_custom_call.1} parent=1 // pred_check_branch
      %21 = sbr.rel (0) target = $region9
    $region8: #{tpu_custom_call.1} parent=1 // pred_region
      %22 = dma.done [#allocation3], 256
    $region9: #{tpu_custom_call.1} parent=1 // pred_fallthru
      _
    %v23 = vld [vmem:[#allocation2] sm:$0xff]
    %v24 = vld [vmem:[#allocation2 + $0x8] sm:$0xff]
    %v25 = vmul.f32 %v23, 0.48655814
    %v26 = vmul.f32 %v24, 0.48655814
    %v27 = vmax.f32 %v25, 0.0
    %v28 = vmax.f32 %v26, 0.0
    %v29 = vand.u32 2147483647, %v25
    %v30 = vand.u32 2147483647, %v26
    %v31 = vsub.f32 0.0, %v29
    %v32 = vsub.f32 0.0, %v30
    %v33 = vmul.f32 %v31, 1.442695
    %v34 = vpow.pop %v33
    %v35 = vmul.f32 %v32, 1.442695
    %v36 = vpow.pop %v35
    %v37 = vadd.f32 %v34, 1.0
    %v38 = vlog2.pop %v37
    %v39 = vmul.f32 %v38, 0.6931472
    %v40 = vmul.f32 -0.5, %v34
    %v41 = vadd.f32 %v40, 1.0
    %v42 = vmul.f32 %v41, %v34
    %v43 = vand.u32 2147483647, %v34
    %vm44 = vcmp.lt.f32.partialorder %v43, 0.0004427343
    %v45 = vsel %vm44, %v42, %v39
    %v46 = vadd.f32 %v36, 1.0
    %v47 = vlog2.pop %v46
    %v48 = vmul.f32 %v47, 0.6931472
    %v49 = vmul.f32 -0.5, %v36
    %v50 = vadd.f32 %v49, 1.0
    %v51 = vmul.f32 %v50, %v36
    %v52 = vand.u32 2147483647, %v36
    %vm53 = vcmp.lt.f32.partialorder %v52, 0.0004427343
    %v54 = vsel %vm53, %v51, %v48
    %v55 = vadd.f32 %v27, %v45
    %v56 = vadd.f32 %v28, %v54
    %v57 = vmul.f32 %v55, 2.0552528
    %v58 = vmul.f32 %v56, 2.0552528
    %59 = vst [vmem:[#allocation5] sm:$0xff] %v57
    %60 = vst [vmem:[#allocation5 + $0x8] sm:$0xff] %v58
    // Predicated region
    $region10: #{tpu_custom_call.1} parent=1 // pred_check
      _
    $region11: #{tpu_custom_call.1} parent=1 // pred_check_branch
      %62 = sbr.rel (0) target = $region13
    $region12: #{tpu_custom_call.1} parent=1 // pred_region
      %s64 = ssub.s32 256, 256
      %65 = vsyncadd [#allocation4], %s64
      %s66 = sshll.u32 [#allocation5], 4
      %s67 = int_to_ptr.vmem [resolvable:$true] %s66
      %72 = dma.vmem_to_hbm [thread:$0]  %s67, 256, %s1, [#allocation4], 128, 128, 8
    $region13: #{tpu_custom_call.1} parent=1 // pred_fallthru
      _
    // Predicated region
    $region14: #{tpu_custom_call.1} parent=1 // pred_check
      _
    $region15: #{tpu_custom_call.1} parent=1 // pred_check_branch
      %74 = sbr.rel (0) target = $region17
    $region16: #{tpu_custom_call.1} parent=1 // pred_region
      %75 = dma.done [#allocation4], 256
    $region17: #{tpu_custom_call.1} parent=1 // pred_fallthru
      _
    %76 = vsyncpa [#allocation3], 1
    %77 = vsyncpa [#allocation4], 1

</llo_original>
